<compile_context>
chip_gen: v7x
topology: tpu7x:2x2x1
jax: 0.10.0
libtpu: 0.0.40
codegen_flags: <defaults>
</compile_context>

<pallas_src>
import jax
import jax.numpy as jnp
from jax.experimental import pallas as pl
from jax.experimental.pallas import tpu as pltpu


def _toy_model_kernel(x_ref, m_ref, b_ref, out_ref):
    # x_ref:   (bm, IF)   batch tile, lane-dense flattened (instance, feature)
    # m_ref:   (IF, IF)   block-diagonal projector  M[i*F+f, i*F+g] = sum_h W[i,h,f] W[i,h,g]
    # b_ref:   (1, IF)    flattened final bias
    # out_ref: (bm, IF)
    x = x_ref[...].astype(jnp.float32)
    m = m_ref[...].astype(jnp.float32)
    b = b_ref[...].astype(jnp.float32)
    y = jnp.dot(x, m, preferred_element_type=jnp.float32) + b
    out_ref[...] = jnp.maximum(y, 0.0).astype(out_ref.dtype)


def toy_model_forward(features, W, b_final, *, block_rows=1024, force_pallas=False):
    """features: (batch, n_instances, n_features)
       W:        (n_instances, n_hidden, n_features)
       b_final:  (n_instances, n_features)
       returns   (batch, n_instances, n_features)"""
    B, I, F = features.shape
    IF = I * F

    # Dispatch threshold: at very small sizes the pallas_call launch overhead
    # exceeds any kernel gain; let XLA's fused VPU path handle it.
    if not force_pallas and B * IF < (1 << 14):
        h = jnp.einsum("bif,ihf->bih", features, W)
        y = jnp.einsum("bih,ihf->bif", h, W) + b_final[None, :, :]
        return jax.nn.relu(y)

    # Precompute the per-instance projector P_i = W_i^T W_i and embed it as a
    # block-diagonal (IF, IF) matrix so the kernel is a single matmul.
    P = jnp.einsum("ihf,ihg->ifg", W, W)                       # (I, F, F)
    eye = jnp.eye(I, dtype=W.dtype)
    M = jnp.einsum("ij,ifg->ifjg", eye, P).reshape(IF, IF)      # (IF, IF)
    b2 = b_final.reshape(1, IF)
    x2 = features.reshape(B, IF)

    # Batch tiling: single block for small batches (no per-step overhead);
    # fixed multiple-of-8 tile for large batches (pad the tail if needed).
    if B <= block_rows:
        bm, Bp = B, B
    else:
        bm = block_rows
        Bp = pl.cdiv(B, bm) * bm
        if Bp != B:
            x2 = jnp.pad(x2, ((0, Bp - B), (0, 0)))
    n_tiles = Bp // bm

    # VMEM budget: double-buffered input + output tiles, resident M and bias,
    # 2x headroom, clamped under the 32 MiB scoped default (safe on v7x too).
    elt = 4  # f32 bytes
    vmem_bytes = elt * (4 * bm * IF + 2 * IF * IF + 2 * IF)
    vmem_limit = min(max(2 * vmem_bytes, 4 * 1024 * 1024), 32 * 1024 * 1024)

    out2 = pl.pallas_call(
        _toy_model_kernel,
        out_shape=jax.ShapeDtypeStruct((Bp, IF), features.dtype),
        grid=(n_tiles,),
        in_specs=[
            pl.BlockSpec((bm, IF), lambda i: (i, 0)),    # batch tile
            pl.BlockSpec((IF, IF), lambda i: (0, 0)),    # projector, resident
            pl.BlockSpec((1, IF), lambda i: (0, 0)),     # bias, resident
        ],
        out_specs=pl.BlockSpec((bm, IF), lambda i: (i, 0)),
        compiler_params=pltpu.CompilerParams(
            dimension_semantics=(("parallel",) if n_tiles > 1 else ("arbitrary",)),
            vmem_limit_bytes=vmem_limit,
        ),
    )(x2, M, b2)

    return out2[:B].reshape(B, I, F)


def reference_forward(features, W, b_final):
    h = jnp.einsum("bif,ihf->bih", features, W)
    y = jnp.einsum("bih,ihf->bif", h, W) + b_final[None, :, :]
    return jax.nn.relu(y)


if __name__ == "__main__":
    # Config(n_instances=10, n_features=5, n_hidden=2)
    n_instances, n_features, n_hidden = 10, 5, 2
    batch = 8

    key = jax.random.PRNGKey(0)
    k_w, k_feat, k_seed = jax.random.split(key, 3)

    # Deterministic parameter init, matching Model.__init__ shapes/scales.
    sf = (2.0 / (n_hidden + n_features)) ** 0.5
    W = jax.random.normal(k_w, (n_instances, n_hidden, n_features), jnp.float32) * sf
    b_final = jnp.zeros((n_instances, n_features), jnp.float32)

    # Synthetic sparse feature batch (mirrors generate_batch semantics).
    feature_probability = (20.0 ** (-jnp.linspace(0.0, 1.0, n_instances)))[:, None]
    feat = jax.random.uniform(k_feat, (batch, n_instances, n_features), jnp.float32)
    seeds = jax.random.uniform(k_seed, (batch, n_instances, n_features), jnp.float32)
    features = jnp.where(seeds <= feature_probability[None, :, :], feat, 0.0)

    # force_pallas=True so the tiny demo batch actually exercises the kernel
    # (production callers at this size would take the cheap XLA fallback).
    out = toy_model_forward(features, W, b_final, force_pallas=True)
    out = jax.block_until_ready(out)

    ref = reference_forward(features, W, b_final)
    assert out.shape == (batch, n_instances, n_features)
    assert jnp.allclose(out, ref, atol=1e-5, rtol=1e-5), "mismatch vs reference"

    print("KERNEL_OK")
</pallas_src>

<mosaic_0001>
module attributes {stable_mosaic.version = 11 : i64} {
  func.func @_toy_model_kernel(%arg0: i32, %arg1: memref<8x50xf32, #tpu.memory_space<vmem>>, %arg2: memref<50x50xf32, #tpu.memory_space<vmem>>, %arg3: memref<1x50xf32, #tpu.memory_space<vmem>>, %arg4: memref<8x50xf32, #tpu.memory_space<vmem>>) attributes {dimension_semantics = [#tpu.dimension_semantics<arbitrary>], iteration_bounds = array<i64: 1>, scalar_prefetch = 0 : i64, scratch_operands = 0 : i64, tpu.core_type = #tpu.core_type<tc>, window_params = [{transform_indices = @transform_0, window_bounds = array<i64: 8, 50>}, {pipeline_mode = #tpu.pipeline_mode<synchronous>, transform_indices = @transform_1, window_bounds = array<i64: 50, 50>}, {pipeline_mode = #tpu.pipeline_mode<synchronous>, transform_indices = @transform_2, window_bounds = array<i64: 1, 50>}, {transform_indices = @transform_3, window_bounds = array<i64: 8, 50>}]} {
    %c0 = arith.constant 0 : index
    %c0_0 = arith.constant 0 : index
    %0 = vector.load %arg1[%c0, %c0_0] : memref<8x50xf32, #tpu.memory_space<vmem>>, vector<8x50xf32>
    %c0_1 = arith.constant 0 : index
    %c0_2 = arith.constant 0 : index
    %1 = vector.load %arg2[%c0_1, %c0_2] : memref<50x50xf32, #tpu.memory_space<vmem>>, vector<50x50xf32>
    %c0_3 = arith.constant 0 : index
    %c0_4 = arith.constant 0 : index
    %2 = vector.load %arg3[%c0_3, %c0_4] : memref<1x50xf32, #tpu.memory_space<vmem>>, vector<1x50xf32>
    %cst = arith.constant dense<0.000000e+00> : vector<8x50xf32>
    %3 = tpu.matmul %0, %1, %cst {dimension_numbers = #tpu.dot_dimension_numbers<[1], [0], [0], [1], [0, 0, 1, 1], [], []>} : vector<8x50xf32>, vector<50x50xf32>, vector<8x50xf32> -> vector<8x50xf32>
    %4 = vector.broadcast %2 : vector<1x50xf32> to vector<8x50xf32>
    %5 = arith.addf %3, %4 : vector<8x50xf32>
    %cst_5 = arith.constant 0.000000e+00 : f32
    %6 = vector.broadcast %cst_5 : f32 to vector<8x50xf32>
    %7 = arith.maximumf %5, %6 : vector<8x50xf32>
    %c0_6 = arith.constant 0 : index
    %c0_7 = arith.constant 0 : index
    %8 = vector.load %arg4[%c0_6, %c0_7] : memref<8x50xf32, #tpu.memory_space<vmem>>, vector<8x50xf32>
    tpu.vector_store %arg4[%c0_6, %c0_7], %7 {strides = array<i32>} : memref<8x50xf32, #tpu.memory_space<vmem>>, vector<8x50xf32>,
    return
  }
  func.func @transform_0(%arg0: i32) -> (i32, i32) {
    %c0_i32 = arith.constant 0 : i32
    %c0_i32_0 = arith.constant 0 : i32
    return %arg0, %c0_i32 : i32, i32
  }
  func.func @transform_1(%arg0: i32) -> (i32, i32) {
    %c0_i32 = arith.constant 0 : i32
    %c0_i32_0 = arith.constant 0 : i32
    %c0_i32_1 = arith.constant 0 : i32
    return %c0_i32, %c0_i32_0 : i32, i32
  }
  func.func @transform_2(%arg0: i32) -> (i32, i32) {
    %c0_i32 = arith.constant 0 : i32
    %c0_i32_0 = arith.constant 0 : i32
    %c0_i32_1 = arith.constant 0 : i32
    return %c0_i32, %c0_i32_0 : i32, i32
  }
  func.func @transform_3(%arg0: i32) -> (i32, i32) {
    %c0_i32 = arith.constant 0 : i32
    %c0_i32_0 = arith.constant 0 : i32
    return %arg0, %c0_i32 : i32, i32
  }
}

</mosaic_0001>

<llo_original>
// kernel: tpu_custom_call.1
$region0: #{tpu_custom_call.1}
  #allocation0 [shape = 'u32[]', space=smem, size = 0x4, offset = 0x4, fixed_abs, tag = 'smem constant byte address 0x4 - core index']
  #allocation1 [shape = 'u32[144,128]{1,0:T(1,128)}', space=vmem, size = 0x12000, scoped, tag = 'internal scratch']
  %s0 = inlined_call_operand.hbm [shape: f32[8,50], index: 0, kind: input, shape index: {}]
  %s1 = inlined_call_operand.hbm [shape: f32[50,50], index: 1, kind: input, shape index: {}]
  %s2 = inlined_call_operand.vmem [shape: f32[1,50], index: 2, kind: input, shape index: {}]
  %s3 = inlined_call_operand.hbm [shape: f32[8,50], index: 3, kind: output, shape index: {}]
  %s4 = sld [smem:[#allocation0]]
  $region30: #{tpu_custom_call.1} parent=0
    _
  %s6 = ssub.s32 1, %s4
  %s7 = scalar_select 0, %s6, %s4
  $region1: #{tpu_custom_call.1} parent=0
    #allocation2 [shape = 'u8[4096]{0}', space=vmem, size = 0x1000, scoped, tag = 'input window, operand 0, single buffered']
    #allocation3 [shape = 's32[1]{0}', space=sflag, size = 0x4, scoped, tag = 'scoped memory for tpu_custom_call.1']
    #allocation4 [shape = 's32[1]{0}', space=sflag, size = 0x4, scoped, tag = 'scoped memory for tpu_custom_call.1']
    #allocation5 [shape = 'u8[28672]{0}', space=vmem, size = 0x7000, scoped, tag = 'input window, operand 1, single buffered']
    #allocation6 [shape = 's32[1]{0}', space=sflag, size = 0x4, scoped, tag = 'scoped memory for tpu_custom_call.1']
    #allocation7 [shape = 'u8[4096]{0}', space=vmem, size = 0x1000, scoped, tag = 'output window, operand 0, single buffered']
    %8 = vsyncpa [#allocation3], 0
    %9 = vsyncpa [#allocation6], 0
    %10 = vsyncpa [#allocation4], 0
    // Predicated region
    $region2: #{tpu_custom_call.1} parent=1 // pred_check
      _
    $region3: #{tpu_custom_call.1} parent=1 // pred_check_branch
      %12 = sbr.rel (0) target = $region5
    $region4: #{tpu_custom_call.1} parent=1 // pred_region
      %s14 = ssub.s32 128, 128
      %15 = vsyncadd [#allocation3], %s14
      %s17 = sshll.u32 [#allocation2], 4
      %s18 = int_to_ptr.vmem [resolvable:$true] %s17
      %20 = dma.hbm_to_vmem [thread:$0]  %s0, 128, %s18, [#allocation3]
    $region5: #{tpu_custom_call.1} parent=1 // pred_fallthru
      _
    // Predicated region
    $region6: #{tpu_custom_call.1} parent=1 // pred_check
      _
    $region7: #{tpu_custom_call.1} parent=1 // pred_check_branch
      %22 = sbr.rel (0) target = $region9
    $region8: #{tpu_custom_call.1} parent=1 // pred_region
      %s24 = ssub.s32 896, 896
      %25 = vsyncadd [#allocation6], %s24
      %s26 = sshll.u32 [#allocation5], 4
      %s27 = int_to_ptr.vmem [resolvable:$true] %s26
      %32 = dma.hbm_to_vmem [thread:$0]  %s1, 896, %s27, [#allocation6], 128, 128, 8
    $region9: #{tpu_custom_call.1} parent=1 // pred_fallthru
      _
    // Predicated region
    $region10: #{tpu_custom_call.1} parent=1 // pred_check
      _
    $region11: #{tpu_custom_call.1} parent=1 // pred_check_branch
      %34 = sbr.rel (0) target = $region13
    $region12: #{tpu_custom_call.1} parent=1 // pred_region
      _
    $region13: #{tpu_custom_call.1} parent=1 // pred_fallthru
      _
    // Predicated region
    $region14: #{tpu_custom_call.1} parent=1 // pred_check
      _
    $region15: #{tpu_custom_call.1} parent=1 // pred_check_branch
      %36 = sbr.rel (0) target = $region17
    $region16: #{tpu_custom_call.1} parent=1 // pred_region
      %37 = dma.done [#allocation3], 128
    $region17: #{tpu_custom_call.1} parent=1 // pred_fallthru
      _
    // Predicated region
    $region18: #{tpu_custom_call.1} parent=1 // pred_check
      _
    $region19: #{tpu_custom_call.1} parent=1 // pred_check_branch
      %39 = sbr.rel (0) target = $region21
    $region20: #{tpu_custom_call.1} parent=1 // pred_region
      %40 = dma.done [#allocation6], 896
    $region21: #{tpu_custom_call.1} parent=1 // pred_fallthru
      _
    %v41 = vld [vmem:[#allocation2] sm:$0xff]
    %v42 = vld [vmem:[#allocation5] sm:$0xff]
    %v43 = vld [vmem:[#allocation5 + $0x8] sm:$0xff]
    %v44 = vld [vmem:[#allocation5 + $0x10] sm:$0xff]
    %v45 = vld [vmem:[#allocation5 + $0x18] sm:$0xff]
    %v46 = vld [vmem:[#allocation5 + $0x20] sm:$0xff]
    %v47 = vld [vmem:[#allocation5 + $0x28] sm:$0xff]
    %v48 = vld [vmem:[#allocation5 + $0x30] sm:$0x3]
    %v49 = vld [vmem:[%s2] sm:$0x1]
    %v51 = vlaneseq
    %v52 = vshrl.u32 %v51, 7
    %v53 = vsub.s32 0, %v52
    %v54 = vrot.slane %v49, %v53
    %vm56 = vcmask 408576
    %v58 = vsel %vm56, %v41, 0
    %vm60 = vcmask 1041408
    %v62 = vsel %vm60, %v48, 0
    %64 = vmatprep.subr.mxu0 0.0
    %65 = vmatpush1.msra.mxu0 %v42
    %66 = vmatprep.subr.mxu0 0.0
    %67 = vmatpush1.msra.mxu0 %v43
    %68 = vmatprep.subr.mxu0 0.0
    %69 = vmatpush1.msra.mxu0 %v44
    %70 = vmatprep.subr.mxu0 0.0
    %71 = vmatpush1.msra.mxu0 %v45
    %72 = vmatprep.subr.mxu0 0.0
    %73 = vmatpush1.msra.mxu0 %v46
    %74 = vmatprep.subr.mxu0 0.0
    %75 = vmatpush1.msra.mxu0 %v47
    %76 = vmatprep.subr.mxu0 0.0
    %77 = vmatpush1.msra.mxu0 %v62
    %78 = vmatprep.subr.mxu0 0.0
    %79 = vmatpush1.msra.mxu0 0.0
    %80 = vmatprep.subr.mxu0 0.0
    %81 = vmatpush1.msra.mxu0 0.0
    %82 = vmatprep.subr.mxu0 0.0
    %83 = vmatpush1.msra.mxu0 0.0
    %84 = vmatprep.subr.mxu0 0.0
    %85 = vmatpush1.msra.mxu0 0.0
    %86 = vmatprep.subr.mxu0 0.0
    %87 = vmatpush1.msra.mxu0 0.0
    %88 = vmatprep.subr.mxu0 0.0
    %89 = vmatpush1.msra.mxu0 0.0
    %90 = vmatprep.subr.mxu0 0.0
    %91 = vmatpush1.msra.mxu0 0.0
    %92 = vmatprep.subr.mxu0 0.0
    %93 = vmatpush1.msra.mxu0 0.0
    %94 = vmatprep.subr.mxu0 0.0
    %95 = vmatpush1.msra.mxu0 0.0
    %96 = vmatprep.subr.mxu0 0.0
    %97 = vmatpush1.msra.mxu0 0.0
    %98 = vmatprep.subr.mxu0 0.0
    %99 = vmatpush1.msra.mxu0 0.0
    %100 = vmatprep.subr.mxu0 0.0
    %101 = vmatpush1.msra.mxu0 0.0
    %102 = vmatprep.subr.mxu0 0.0
    %103 = vmatpush1.msra.mxu0 0.0
    %104 = vmatprep.subr.mxu0 0.0
    %105 = vmatpush1.msra.mxu0 0.0
    %106 = vmatprep.subr.mxu0 0.0
    %107 = vmatpush1.msra.mxu0 0.0
    %108 = vmatprep.subr.mxu0 0.0
    %109 = vmatpush1.msra.mxu0 0.0
    %110 = vmatprep.subr.mxu0 0.0
    %111 = vmatpush1.msra.mxu0 0.0
    %112 = vmatprep.subr.mxu0 0.0
    %113 = vmatpush1.msra.mxu0 0.0
    %114 = vmatprep.subr.mxu0 0.0
    %115 = vmatpush1.msra.mxu0 0.0
    %116 = vmatprep.subr.mxu0 0.0
    %117 = vmatpush1.msra.mxu0 0.0
    %118 = vmatprep.subr.mxu0 0.0
    %119 = vmatpush1.msra.mxu0 0.0
    %120 = vmatprep.subr.mxu0 0.0
    %121 = vmatpush1.msra.mxu0 0.0
    %122 = vmatprep.subr.mxu0 0.0
    %123 = vmatpush1.msra.mxu0 0.0
    %124 = vmatprep.subr.mxu0 0.0
    %125 = vmatpush1.msra.mxu0 0.0
    %126 = vmatprep.subr.mxu0 0.0
    %127 = vmatpush1.msra.mxu0 0.0
    %128 = vmatprep.mubr.f32.mxu0 0.0
    %129 = vmatmul.mubr.f32.gmra.mrb[0].mxu0 %v58
    %v130 = vpop.f32.mrb[0].mxu0
    %v131 = vadd.f32 %v54, %v130
    %v132 = vpop.f32.mrb[0].mxu0
    %133 = vdwg.mxu0
    %v134 = vmax.f32 %v131, 0.0
    %135 = vst.msk [vmem:[#allocation7] sm:$0xff] %vm56, %v134
    // Predicated region
    $region22: #{tpu_custom_call.1} parent=1 // pred_check
      _
    $region23: #{tpu_custom_call.1} parent=1 // pred_check_branch
      %137 = sbr.rel (0) target = $region25
    $region24: #{tpu_custom_call.1} parent=1 // pred_region
      %s139 = ssub.s32 128, 128
      %140 = vsyncadd [#allocation4], %s139
      %s142 = sshll.u32 [#allocation7], 4
      %s143 = int_to_ptr.vmem [resolvable:$true] %s142
      %145 = dma.vmem_to_hbm [thread:$0]  %s143, 128, %s3, [#allocation4]
    $region25: #{tpu_custom_call.1} parent=1 // pred_fallthru
      _
    // Predicated region
    $region26: #{tpu_custom_call.1} parent=1 // pred_check
      _
    $region27: #{tpu_custom_call.1} parent=1 // pred_check_branch
      %147 = sbr.rel (0) target = $region29
    $region28: #{tpu_custom_call.1} parent=1 // pred_region
      %148 = dma.done [#allocation4], 128
    $region29: #{tpu_custom_call.1} parent=1 // pred_fallthru
      _
    %149 = vsyncpa [#allocation3], 1
    %150 = vsyncpa [#allocation6], 1
    %151 = vsyncpa [#allocation4], 1

</llo_original>
